<compile_context>
chip_gen: v7x
topology: tpu7x:2x2x1
jax: 0.10.0
libtpu: 0.0.40
codegen_flags: <defaults>
</compile_context>

<pallas_src>
import functools
import math

import jax
import jax.numpy as jnp
from jax.experimental import pallas as pl
from jax.experimental.pallas import tpu as pltpu


# ---------------------------------------------------------------------------
# shared helpers
# ---------------------------------------------------------------------------

def _norm_torch(x, alpha, bias, eps):
    # PyTorch `Norm`: alpha * (x - mean) / (std + eps) + bias,
    # where torch.Tensor.std uses the UNBIASED estimator (ddof=1).
    # Exact reciprocal here (it multiplies every activation).
    d = x.shape[-1]
    mean = jnp.mean(x, axis=-1, keepdims=True)
    var = jnp.sum((x - mean) ** 2, axis=-1, keepdims=True) * (1.0 / (d - 1))
    inv = 1.0 / (jnp.sqrt(var) + eps)
    return alpha * (x - mean) * inv + bias


def _const_spec(shape):
    # Replicated (constant-index) parameter block for a 2-axis grid.
    nd = len(shape)
    return pl.BlockSpec(shape, lambda i, j, _nd=nd: (0,) * _nd)


def _pick_tile(n, cap, align):
    # Largest divisor of n that is <= cap and a multiple of `align`;
    # falls back to the full extent (always legal as a block dim).
    cap = min(cap, n)
    t = cap - cap % align
    while t >= align:
        if n % t == 0:
            return t
        t -= align
    return n


def _vmem_limit(nbytes):
    # Explicit scoped-VMEM limit derived from the actual tile footprint
    # (2x headroom), clamped to a range that is safe on v5e/v6e/v7x.
    return int(min(max(2 * nbytes, 32 * 1024 * 1024), 100 * 1024 * 1024))


# ---------------------------------------------------------------------------
# sublayer 1: x + MultiHeadAttention(norm_1(x))     grid = (batch, heads)
# ---------------------------------------------------------------------------

def _attn_kernel(x_ref, mb_ref, n1a_ref, n1b_ref,
                 wqkv_ref, bqkv_ref, wo_ref, bo_ref,
                 o_ref,
                 x2_ref, acc_ref,
                 *, eps, d_k, resident_weights):
    h = pl.program_id(1)

    @pl.when(h == 0)
    def _init():
        x2 = _norm_torch(x_ref[0], n1a_ref[...], n1b_ref[...], eps)
        x2_ref[...] = x2.astype(x2_ref.dtype)       # bf16, reused by all heads
        acc_ref[...] = jnp.zeros_like(acc_ref)

    if resident_weights:
        wqkv = wqkv_ref[h]                           # (D, 3*d_k) bf16
        bqkv = bqkv_ref[h]                           # (1, 3*d_k) fp32
        wo = wo_ref[h]                               # (d_k, D)  bf16
    else:
        wqkv = wqkv_ref[0]
        bqkv = bqkv_ref[0]
        wo = wo_ref[0]

    x2 = x2_ref[...]                                 # (S, D) bf16

    # Fused QKV projection: one MXU matmul with N = 3*d_k; 1/sqrt(d_k) is
    # already folded into the q columns of wqkv / bqkv.
    qkv = jnp.dot(x2, wqkv, preferred_element_type=jnp.float32) + bqkv   # (S, 3dk)
    q = qkv[:, :d_k]
    k = qkv[:, d_k:2 * d_k]
    v = qkv[:, 2 * d_k:]

    # scores = q @ k^T (bf16 MXU, fp32 acc); additive fp32 mask bias after.
    scores = jnp.einsum("qc,kc->qk",
                        q.astype(jnp.bfloat16), k.astype(jnp.bfloat16),
                        preferred_element_type=jnp.float32)              # (S, S)
    scores = scores + mb_ref[0]                                          # (1, S) bias

    m = jnp.max(scores, axis=-1, keepdims=True)
    e = jnp.exp(scores - m)
    denom = jnp.sum(e, axis=-1, keepdims=True)
    probs = e * pl.reciprocal(denom, approx=True)                        # fp32 softmax
    # TODO(synk): attention dropout omitted (eval-mode identity).

    ctx = jnp.dot(probs.astype(jnp.bfloat16), v.astype(jnp.bfloat16),
                  preferred_element_type=jnp.float32)                    # (S, d_k)
    # per-head contribution of the output projection (no concat needed)
    acc_ref[...] += jnp.dot(ctx.astype(jnp.bfloat16), wo,
                            preferred_element_type=jnp.float32)          # (S, D)

    @pl.when(h == pl.num_programs(1) - 1)
    def _finalize():
        # TODO(synk): dropout_1 omitted (eval-mode identity).
        o_ref[0] = (x_ref[0] + acc_ref[...] + bo_ref[...]).astype(o_ref.dtype)


def _mha_block(x, mask_bias, params, heads, eps):
    B, S, D = x.shape
    assert D % heads == 0
    d_k = D // heads
    bf16 = jnp.bfloat16
    f32 = jnp.float32
    inv_sqrt_dk = 1.0 / math.sqrt(d_k)

    # Head-split + fused QKV slab (H, D, 3*d_k); scale folded into q columns.
    def split_heads(w):
        return w.reshape(D, heads, d_k).transpose(1, 0, 2)    # (H, D, d_k)

    wq = split_heads(params["wq"]) * inv_sqrt_dk
    wk = split_heads(params["wk"])
    wv = split_heads(params["wv"])
    wqkv = jnp.concatenate([wq, wk, wv], axis=-1).astype(bf16)           # (H, D, 3dk)
    bq = params["bq"].reshape(heads, 1, d_k) * inv_sqrt_dk
    bk = params["bk"].reshape(heads, 1, d_k)
    bv = params["bv"].reshape(heads, 1, d_k)
    bqkv = jnp.concatenate([bq, bk, bv], axis=-1).astype(f32)            # (H, 1, 3dk)
    wo = params["wo"].reshape(heads, d_k, D).astype(bf16)                # (H, d_k, D)
    bo = params["bo"].reshape(1, D).astype(f32)
    n1a = params["n1a"].reshape(1, D).astype(f32)
    n1b = params["n1b"].reshape(1, D).astype(f32)

    # Keep all attention weights resident in VMEM (constant index maps -> no
    # re-DMA per batch step) unless they would blow the budget; then fall back
    # to streaming one head slab per grid step.
    weight_bytes = 2 * (wqkv.size * 2 + wo.size * 2 + bqkv.size * 4)
    resident = weight_bytes <= 24 * 1024 * 1024

    if resident:
        w_specs = [
            pl.BlockSpec((heads, D, 3 * d_k), lambda b, h: (0, 0, 0)),   # Wqkv (resident)
            pl.BlockSpec((heads, 1, 3 * d_k), lambda b, h: (0, 0, 0)),   # bqkv (resident)
            pl.BlockSpec((heads, d_k, D), lambda b, h: (0, 0, 0)),       # Wo   (resident)
        ]
    else:
        w_specs = [
            pl.BlockSpec((1, D, 3 * d_k), lambda b, h: (h, 0, 0)),       # Wqkv head slab
            pl.BlockSpec((1, 1, 3 * d_k), lambda b, h: (h, 0, 0)),       # bqkv head slab
            pl.BlockSpec((1, d_k, D), lambda b, h: (h, 0, 0)),           # Wo head slab
        ]

    kernel = functools.partial(_attn_kernel, eps=eps, d_k=d_k,
                               resident_weights=resident)

    est = (2 * (S * D * 4 + S * 4 + S * D * 4)        # x / mask / out (double-buffered)
           + weight_bytes + 6 * D * 4                 # weights + bo / norm params
           + S * D * 2 + S * D * 4                    # scratch: x2 (bf16) + acc (f32)
           + S * S * 4 + S * 3 * d_k * 8 + S * D * 4)  # scores / qkv / intermediates

    return pl.pallas_call(
        kernel,
        out_shape=jax.ShapeDtypeStruct((B, S, D), x.dtype),
        grid=(B, heads),
        in_specs=[
            pl.BlockSpec((1, S, D), lambda b, h: (b, 0, 0)),    # x (resident over heads)
            pl.BlockSpec((1, 1, S), lambda b, h: (b, 0, 0)),    # additive fp32 mask bias
            _const_spec((1, D)), _const_spec((1, D)),           # norm_1 alpha / bias
        ] + w_specs + [
            _const_spec((1, D)),                                # bo
        ],
        out_specs=pl.BlockSpec((1, S, D), lambda b, h: (b, 0, 0)),
        scratch_shapes=[
            pltpu.VMEM((S, D), jnp.bfloat16),   # norm_1(x), computed once per batch
            pltpu.VMEM((S, D), jnp.float32),    # attention-output accumulator
        ],
        compiler_params=pltpu.CompilerParams(
            dimension_semantics=("parallel", "arbitrary"),
            vmem_limit_bytes=_vmem_limit(est)),
    )(x, mask_bias, n1a, n1b, wqkv, bqkv, wo, bo)


# ---------------------------------------------------------------------------
# sublayer 2: y + FeedForward(norm_2(y))     grid = (row tiles, d_ff tiles)
# ---------------------------------------------------------------------------

def _ff_kernel(y_ref, n2a_ref, n2b_ref, b2_ref,
               w1_ref, b1_ref, w2_ref,
               o_ref,
               x2_ref, acc_ref,
               *, eps):
    j = pl.program_id(1)

    @pl.when(j == 0)
    def _init():
        x2 = _norm_torch(y_ref[...], n2a_ref[...], n2b_ref[...], eps)
        x2_ref[...] = x2.astype(x2_ref.dtype)                 # bf16, reused across d_ff tiles
        acc_ref[...] = jnp.zeros_like(acc_ref)

    h1 = jnp.dot(x2_ref[...], w1_ref[...],
                 preferred_element_type=jnp.float32) + b1_ref[...]   # (t_r, t_f) fp32
    h1 = jnp.maximum(h1, 0.0)
    # TODO(synk): FeedForward-internal dropout omitted (eval-mode identity).
    acc_ref[...] += jnp.dot(h1.astype(jnp.bfloat16), w2_ref[...],
                            preferred_element_type=jnp.float32)      # (t_r, D) fp32

    @pl.when(j == pl.num_programs(1) - 1)
    def _finalize():
        # TODO(synk): dropout_2 omitted (eval-mode identity).
        o_ref[...] = (y_ref[...] + acc_ref[...] + b2_ref[...]).astype(o_ref.dtype)


def _ff_block(y, params, eps, *, row_tile=1024, ff_tile=512):
    B, S, D = y.shape
    d_ff = params["w1"].shape[-1]
    rows = B * S
    bf16 = jnp.bfloat16
    f32 = jnp.float32

    # Large row tiles amortize W1/W2 HBM streaming; tiles stay (8,128)-aligned
    # (or collapse to the full axis) so the last tile is never ragged.
    t_r = _pick_tile(rows, row_tile, 8)
    t_f = _pick_tile(d_ff, ff_tile, 128)

    y2 = y.reshape(rows, D)
    w1 = params["w1"].astype(bf16)
    w2 = params["w2"].astype(bf16)
    b1 = params["b1"].reshape(1, d_ff).astype(f32)
    b2 = params["b2"].reshape(1, D).astype(f32)
    n2a = params["n2a"].reshape(1, D).astype(f32)
    n2b = params["n2b"].reshape(1, D).astype(f32)

    kernel = functools.partial(_ff_kernel, eps=eps)

    est = (2 * (t_r * D * 4 + D * t_f * 2 + t_f * 4 + t_f * D * 2 + t_r * D * 4)
           + 4 * D * 4
           + t_r * D * 2 + t_r * D * 4          # scratch: x2 (bf16) + acc (f32)
           + 2 * t_r * t_f * 4)                 # h1 intermediate headroom

    out = pl.pallas_call(
        kernel,
        out_shape=jax.ShapeDtypeStruct((rows, D), y.dtype),
        grid=(rows // t_r, d_ff // t_f),
        in_specs=[
            pl.BlockSpec((t_r, D), lambda i, j: (i, 0)),       # y rows (resident across j)
            _const_spec((1, D)), _const_spec((1, D)),          # norm_2 alpha / bias
            _const_spec((1, D)),                               # b2
            pl.BlockSpec((D, t_f), lambda i, j: (0, j)),       # W1 column tile (streamed)
            pl.BlockSpec((1, t_f), lambda i, j: (0, j)),       # b1 tile
            pl.BlockSpec((t_f, D), lambda i, j: (j, 0)),       # W2 row tile (streamed)
        ],
        out_specs=pl.BlockSpec((t_r, D), lambda i, j: (i, 0)),
        scratch_shapes=[
            pltpu.VMEM((t_r, D), jnp.bfloat16),   # norm_2(y) for this row tile
            pltpu.VMEM((t_r, D), jnp.float32),    # feed-forward output accumulator
        ],
        compiler_params=pltpu.CompilerParams(
            dimension_semantics=("parallel", "arbitrary"),
            vmem_limit_bytes=_vmem_limit(est)),
    )(y2, n2a, n2b, b2, w1, b1, w2)
    return out.reshape(B, S, D)


# ---------------------------------------------------------------------------
# public wrapper
# ---------------------------------------------------------------------------

def encoder_layer_pallas(x, mask, params, heads, eps=1e-6):
    # Hoist mask handling out of the kernels: additive fp32 bias (0 / -1e9).
    mask_bias = jnp.where(mask == 0, -1e9, 0.0).astype(jnp.float32)
    y = _mha_block(x, mask_bias, params, heads, eps)
    return _ff_block(y, params, eps)


# ---------------------------------------------------------------------------
# pure-JAX fp32 reference mirroring the PyTorch forward (eval mode)
# ---------------------------------------------------------------------------

def encoder_layer_ref(x, mask, params, heads, eps=1e-6):
    B, S, D = x.shape
    d_k = D // heads

    def norm(x, a, b):
        mean = jnp.mean(x, axis=-1, keepdims=True)
        var = jnp.sum((x - mean) ** 2, axis=-1, keepdims=True) / (D - 1)
        return a * (x - mean) / (jnp.sqrt(var) + eps) + b

    x2 = norm(x, params["n1a"], params["n1b"])
    q = (x2 @ params["wq"] + params["bq"]).reshape(B, S, heads, d_k).transpose(0, 2, 1, 3)
    k = (x2 @ params["wk"] + params["bk"]).reshape(B, S, heads, d_k).transpose(0, 2, 1, 3)
    v = (x2 @ params["wv"] + params["bv"]).reshape(B, S, heads, d_k).transpose(0, 2, 1, 3)
    scores = jnp.einsum("bhqd,bhkd->bhqk", q, k) / math.sqrt(d_k)
    m = mask[:, None, :, :]                      # (B,1,1,S)
    scores = jnp.where(m == 0, -1e9, scores)
    probs = jax.nn.softmax(scores, axis=-1)
    out = jnp.einsum("bhqk,bhkd->bhqd", probs, v).transpose(0, 2, 1, 3).reshape(B, S, D)
    x = x + (out @ params["wo"] + params["bo"])

    x2 = norm(x, params["n2a"], params["n2b"])
    ff = jnp.maximum(x2 @ params["w1"] + params["b1"], 0.0) @ params["w2"] + params["b2"]
    return x + ff


def make_params(key, d_model, d_ff):
    ks = jax.random.split(key, 8)
    s_in = 1.0 / math.sqrt(d_model)
    s_ff = 1.0 / math.sqrt(d_ff)
    return {
        "n1a": jnp.ones((d_model,), jnp.float32),
        "n1b": jnp.zeros((d_model,), jnp.float32),
        "wq": jax.random.uniform(ks[0], (d_model, d_model), jnp.float32, -s_in, s_in),
        "bq": jnp.zeros((d_model,), jnp.float32),
        "wk": jax.random.uniform(ks[1], (d_model, d_model), jnp.float32, -s_in, s_in),
        "bk": jnp.zeros((d_model,), jnp.float32),
        "wv": jax.random.uniform(ks[2], (d_model, d_model), jnp.float32, -s_in, s_in),
        "bv": jnp.zeros((d_model,), jnp.float32),
        "wo": jax.random.uniform(ks[3], (d_model, d_model), jnp.float32, -s_in, s_in),
        "bo": jax.random.uniform(ks[4], (d_model,), jnp.float32, -s_in, s_in),
        "n2a": jnp.ones((d_model,), jnp.float32),
        "n2b": jnp.zeros((d_model,), jnp.float32),
        "w1": jax.random.uniform(ks[5], (d_model, d_ff), jnp.float32, -s_in, s_in),
        "b1": jnp.zeros((d_ff,), jnp.float32),
        "w2": jax.random.uniform(ks[6], (d_ff, d_model), jnp.float32, -s_ff, s_ff),
        "b2": jax.random.uniform(ks[7], (d_model,), jnp.float32, -s_ff, s_ff),
    }


if __name__ == "__main__":
    B, S, D, H = 2, 8, 32, 4
    D_FF = 2048  # FeedForward default d_ff

    key = jax.random.PRNGKey(0)
    kx, kp = jax.random.split(key)
    x = jax.random.normal(kx, (B, S, D), jnp.float32)
    # mask: (B, 1, S); last position of batch 1 masked out, everything else visible
    mask = jnp.ones((B, 1, S), jnp.int32).at[1, 0, S - 1].set(0)

    params = make_params(kp, D, D_FF)

    out = encoder_layer_pallas(x, mask, params, heads=H)
    out = jax.block_until_ready(out)

    ref = encoder_layer_ref(x, mask, params, heads=H)
    assert out.shape == (B, S, D)
    # bf16 MXU operands with fp32 accumulation -> looser tolerance than pure fp32.
    assert jnp.allclose(out, ref, atol=2e-2, rtol=2e-2), "mismatch vs JAX reference"

    print("KERNEL_OK")
</pallas_src>

<mosaic_0001>
module attributes {stable_mosaic.version = 11 : i64} {
  func.func @_attn_kernel(%arg0: i32, %arg1: i32, %arg2: memref<1x8x32xf32, #tpu.memory_space<vmem>>, %arg3: memref<1x1x8xf32, #tpu.memory_space<vmem>>, %arg4: memref<1x32xf32, #tpu.memory_space<vmem>>, %arg5: memref<1x32xf32, #tpu.memory_space<vmem>>, %arg6: memref<4x32x24xbf16, #tpu.memory_space<vmem>>, %arg7: memref<4x1x24xf32, #tpu.memory_space<vmem>>, %arg8: memref<4x8x32xbf16, #tpu.memory_space<vmem>>, %arg9: memref<1x32xf32, #tpu.memory_space<vmem>>, %arg10: memref<1x8x32xf32, #tpu.memory_space<vmem>>, %arg11: memref<8x32xbf16, #tpu.memory_space<vmem>>, %arg12: memref<8x32xf32, #tpu.memory_space<vmem>>) attributes {dimension_semantics = [#tpu.dimension_semantics<parallel>, #tpu.dimension_semantics<arbitrary>], iteration_bounds = array<i64: 2, 4>, scalar_prefetch = 0 : i64, scratch_operands = 2 : i64, tpu.core_type = #tpu.core_type<tc>, window_params = [{transform_indices = @transform_0, window_bounds = array<i64: 1, 8, 32>}, {transform_indices = @transform_1, window_bounds = array<i64: 1, 1, 8>}, {pipeline_mode = #tpu.pipeline_mode<synchronous>, transform_indices = @transform_2, window_bounds = array<i64: 1, 32>}, {pipeline_mode = #tpu.pipeline_mode<synchronous>, transform_indices = @transform_3, window_bounds = array<i64: 1, 32>}, {pipeline_mode = #tpu.pipeline_mode<synchronous>, transform_indices = @transform_4, window_bounds = array<i64: 4, 32, 24>}, {pipeline_mode = #tpu.pipeline_mode<synchronous>, transform_indices = @transform_5, window_bounds = array<i64: 4, 1, 24>}, {pipeline_mode = #tpu.pipeline_mode<synchronous>, transform_indices = @transform_6, window_bounds = array<i64: 4, 8, 32>}, {pipeline_mode = #tpu.pipeline_mode<synchronous>, transform_indices = @transform_7, window_bounds = array<i64: 1, 32>}, {transform_indices = @transform_8, window_bounds = array<i64: 1, 8, 32>}]} {
    %c0_i32 = arith.constant 0 : i32
    %0 = arith.cmpi eq, %arg1, %c0_i32 : i32
    %1 = arith.extui %0 : i1 to i32
    %c0_i32_0 = arith.constant 0 : i32
    %2 = arith.cmpi ne, %1, %c0_i32_0 : i32
    scf.if %2 {
      %c0_21 = arith.constant 0 : index
      %c0_22 = arith.constant 0 : index
      %c0_23 = arith.constant 0 : index
      %47 = vector.load %arg2[%c0_21, %c0_22, %c0_23] : memref<1x8x32xf32, #tpu.memory_space<vmem>>, vector<1x8x32xf32>
      %48 = vector.shape_cast %47 : vector<1x8x32xf32> to vector<8x32xf32>
      %c0_24 = arith.constant 0 : index
      %c0_25 = arith.constant 0 : index
      %49 = vector.load %arg4[%c0_24, %c0_25] : memref<1x32xf32, #tpu.memory_space<vmem>>, vector<1x32xf32>
      %c0_26 = arith.constant 0 : index
      %c0_27 = arith.constant 0 : index
      %50 = vector.load %arg5[%c0_26, %c0_27] : memref<1x32xf32, #tpu.memory_space<vmem>>, vector<1x32xf32>
      %cst_28 = arith.constant dense<0.000000e+00> : vector<8xf32>
      %51 = vector.multi_reduction <add>, %48, %cst_28 [1] : vector<8x32xf32> to vector<8xf32>
      %52 = vector.shape_cast %51 : vector<8xf32> to vector<8x1xf32>
      %cst_29 = arith.constant 3.200000e+01 : f32
      %53 = vector.broadcast %cst_29 : f32 to vector<8x1xf32>
      %54 = arith.divf %52, %53 : vector<8x1xf32>
      %55 = vector.broadcast %54 : vector<8x1xf32> to vector<8x32xf32>
      %56 = arith.subf %48, %55 : vector<8x32xf32>
      %57 = arith.mulf %56, %56 : vector<8x32xf32>
      %cst_30 = arith.constant dense<0.000000e+00> : vector<8xf32>
      %58 = vector.multi_reduction <add>, %57, %cst_30 [1] : vector<8x32xf32> to vector<8xf32>
      %59 = vector.shape_cast %58 : vector<8xf32> to vector<8x1xf32>
      %cst_31 = arith.constant 0.0322580636 : f32
      %60 = vector.broadcast %cst_31 : f32 to vector<8x1xf32>
      %61 = arith.mulf %59, %60 : vector<8x1xf32>
      %62 = math.sqrt %61 : vector<8x1xf32>
      %cst_32 = arith.constant 9.99999997E-7 : f32
      %63 = vector.broadcast %cst_32 : f32 to vector<8x1xf32>
      %64 = arith.addf %62, %63 : vector<8x1xf32>
      %cst_33 = arith.constant 1.000000e+00 : f32
      %65 = vector.broadcast %cst_33 : f32 to vector<8x1xf32>
      %66 = arith.divf %65, %64 : vector<8x1xf32>
      %67 = vector.broadcast %54 : vector<8x1xf32> to vector<8x32xf32>
      %68 = arith.subf %48, %67 : vector<8x32xf32>
      %69 = vector.broadcast %49 : vector<1x32xf32> to vector<8x32xf32>
      %70 = arith.mulf %69, %68 : vector<8x32xf32>
      %71 = vector.broadcast %66 : vector<8x1xf32> to vector<8x32xf32>
      %72 = arith.mulf %70, %71 : vector<8x32xf32>
      %73 = vector.broadcast %50 : vector<1x32xf32> to vector<8x32xf32>
      %74 = arith.addf %72, %73 : vector<8x32xf32>
      %75 = arith.truncf %74 : vector<8x32xf32> to vector<8x32xbf16>
      %c0_34 = arith.constant 0 : index
      %c0_35 = arith.constant 0 : index
      %76 = vector.load %arg11[%c0_34, %c0_35] : memref<8x32xbf16, #tpu.memory_space<vmem>>, vector<8x32xbf16>
      tpu.vector_store %arg11[%c0_34, %c0_35], %75 {strides = array<i32>} : memref<8x32xbf16, #tpu.memory_space<vmem>>, vector<8x32xbf16>,
      %cst_36 = arith.constant 0.000000e+00 : f32
      %77 = vector.broadcast %cst_36 : f32 to vector<8x32xf32>
      %c0_37 = arith.constant 0 : index
      %c0_38 = arith.constant 0 : index
      %78 = vector.load %arg12[%c0_37, %c0_38] : memref<8x32xf32, #tpu.memory_space<vmem>>, vector<8x32xf32>
      tpu.vector_store %arg12[%c0_37, %c0_38], %77 {strides = array<i32>} : memref<8x32xf32, #tpu.memory_space<vmem>>, vector<8x32xf32>,
    } else {
    }
    %3 = arith.index_cast %arg1 : i32 to index
    %c0 = arith.constant 0 : index
    %c0_1 = arith.constant 0 : index
    %4 = vector.load %arg6[%3, %c0, %c0_1] : memref<4x32x24xbf16, #tpu.memory_space<vmem>>, vector<1x32x24xbf16>
    %5 = vector.shape_cast %4 : vector<1x32x24xbf16> to vector<32x24xbf16>
    %6 = arith.index_cast %arg1 : i32 to index
    %c0_2 = arith.constant 0 : index
    %c0_3 = arith.constant 0 : index
    %7 = vector.load %arg7[%6, %c0_2, %c0_3] : memref<4x1x24xf32, #tpu.memory_space<vmem>>, vector<1x1x24xf32>
    %8 = vector.shape_cast %7 : vector<1x1x24xf32> to vector<1x24xf32>
    %9 = arith.index_cast %arg1 : i32 to index
    %c0_4 = arith.constant 0 : index
    %c0_5 = arith.constant 0 : index
    %10 = vector.load %arg8[%9, %c0_4, %c0_5] : memref<4x8x32xbf16, #tpu.memory_space<vmem>>, vector<1x8x32xbf16>
    %11 = vector.shape_cast %10 : vector<1x8x32xbf16> to vector<8x32xbf16>
    %c0_6 = arith.constant 0 : index
    %c0_7 = arith.constant 0 : index
    %12 = vector.load %arg11[%c0_6, %c0_7] : memref<8x32xbf16, #tpu.memory_space<vmem>>, vector<8x32xbf16>
    %cst = arith.constant dense<0.000000e+00> : vector<8x24xf32>
    %13 = tpu.matmul %12, %5, %cst {dimension_numbers = #tpu.dot_dimension_numbers<[1], [0], [0], [1], [0, 0, 1, 1], [], []>} : vector<8x32xbf16>, vector<32x24xbf16>, vector<8x24xf32> -> vector<8x24xf32>
    %14 = vector.broadcast %8 : vector<1x24xf32> to vector<8x24xf32>
    %15 = arith.addf %13, %14 : vector<8x24xf32>
    %16 = vector.extract_strided_slice %15 {offsets = [0, 0], sizes = [8, 8], strides = [1, 1]} : vector<8x24xf32> to vector<8x8xf32>
    %17 = vector.extract_strided_slice %15 {offsets = [0, 8], sizes = [8, 8], strides = [1, 1]} : vector<8x24xf32> to vector<8x8xf32>
    %18 = vector.extract_strided_slice %15 {offsets = [0, 16], sizes = [8, 8], strides = [1, 1]} : vector<8x24xf32> to vector<8x8xf32>
    %19 = arith.truncf %16 : vector<8x8xf32> to vector<8x8xbf16>
    %20 = arith.truncf %17 : vector<8x8xf32> to vector<8x8xbf16>
    "tpu.trace_start"() <{level = 10 : i32, message = "qc,kc->qk"}> : () -> ()
    %cst_8 = arith.constant dense<0.000000e+00> : vector<8x8xf32>
    %21 = tpu.matmul %19, %20, %cst_8 {dimension_numbers = #tpu.dot_dimension_numbers<[1], [1], [0], [0], [0, 0, 1, 0], [], []>} : vector<8x8xbf16>, vector<8x8xbf16>, vector<8x8xf32> -> vector<8x8xf32>
    "tpu.trace_stop"() : () -> ()
    %c0_9 = arith.constant 0 : index
    %c0_10 = arith.constant 0 : index
    %c0_11 = arith.constant 0 : index
    %22 = vector.load %arg3[%c0_9, %c0_10, %c0_11] : memref<1x1x8xf32, #tpu.memory_space<vmem>>, vector<1x1x8xf32>
    %23 = vector.shape_cast %22 : vector<1x1x8xf32> to vector<1x8xf32>
    %24 = vector.broadcast %23 : vector<1x8xf32> to vector<8x8xf32>
    %25 = arith.addf %21, %24 : vector<8x8xf32>
    %cst_12 = arith.constant dense<0xFF800000> : vector<8xf32>
    %26 = vector.multi_reduction <maximumf>, %25, %cst_12 [1] : vector<8x8xf32> to vector<8xf32>
    %27 = vector.shape_cast %26 : vector<8xf32> to vector<8x1xf32>
    %28 = vector.broadcast %27 : vector<8x1xf32> to vector<8x8xf32>
    %29 = arith.subf %25, %28 : vector<8x8xf32>
    %30 = math.exp %29 : vector<8x8xf32>
    %cst_13 = arith.constant dense<0.000000e+00> : vector<8xf32>
    %31 = vector.multi_reduction <add>, %30, %cst_13 [1] : vector<8x8xf32> to vector<8xf32>
    %32 = vector.shape_cast %31 : vector<8xf32> to vector<8x1xf32>
    %33 = tpu.reciprocal %32 {approx = true} : vector<8x1xf32> -> vector<8x1xf32>
    %34 = vector.broadcast %33 : vector<8x1xf32> to vector<8x8xf32>
    %35 = arith.mulf %30, %34 : vector<8x8xf32>
    %36 = arith.truncf %35 : vector<8x8xf32> to vector<8x8xbf16>
    %37 = arith.truncf %18 : vector<8x8xf32> to vector<8x8xbf16>
    %cst_14 = arith.constant dense<0.000000e+00> : vector<8x8xf32>
    %38 = tpu.matmul %36, %37, %cst_14 {dimension_numbers = #tpu.dot_dimension_numbers<[1], [0], [0], [1], [0, 0, 1, 1], [], []>} : vector<8x8xbf16>, vector<8x8xbf16>, vector<8x8xf32> -> vector<8x8xf32>
    %c0_15 = arith.constant 0 : index
    %c0_16 = arith.constant 0 : index
    %39 = vector.load %arg12[%c0_15, %c0_16] : memref<8x32xf32, #tpu.memory_space<vmem>>, vector<8x32xf32>
    %40 = arith.truncf %38 : vector<8x8xf32> to vector<8x8xbf16>
    %cst_17 = arith.constant dense<0.000000e+00> : vector<8x32xf32>
    %41 = tpu.matmul %40, %11, %cst_17 {dimension_numbers = #tpu.dot_dimension_numbers<[1], [0], [0], [1], [0, 0, 1, 1], [], []>} : vector<8x8xbf16>, vector<8x32xbf16>, vector<8x32xf32> -> vector<8x32xf32>
    %42 = arith.addf %39, %41 : vector<8x32xf32>
    %c0_18 = arith.constant 0 : index
    %c0_19 = arith.constant 0 : index
    %43 = vector.load %arg12[%c0_18, %c0_19] : memref<8x32xf32, #tpu.memory_space<vmem>>, vector<8x32xf32>
    tpu.vector_store %arg12[%c0_18, %c0_19], %42 {strides = array<i32>} : memref<8x32xf32, #tpu.memory_space<vmem>>, vector<8x32xf32>,
    %c3_i32 = arith.constant 3 : i32
    %44 = arith.cmpi eq, %arg1, %c3_i32 : i32
    %45 = arith.extui %44 : i1 to i32
    %c0_i32_20 = arith.constant 0 : i32
    %46 = arith.cmpi ne, %45, %c0_i32_20 : i32
    scf.if %46 {
      %c0_21 = arith.constant 0 : index
      %c0_22 = arith.constant 0 : index
      %c0_23 = arith.constant 0 : index
      %47 = vector.load %arg2[%c0_21, %c0_22, %c0_23] : memref<1x8x32xf32, #tpu.memory_space<vmem>>, vector<1x8x32xf32>
      %48 = vector.shape_cast %47 : vector<1x8x32xf32> to vector<8x32xf32>
      %c0_24 = arith.constant 0 : index
      %c0_25 = arith.constant 0 : index
      %49 = vector.load %arg12[%c0_24, %c0_25] : memref<8x32xf32, #tpu.memory_space<vmem>>, vector<8x32xf32>
      %50 = arith.addf %48, %49 : vector<8x32xf32>
      %c0_26 = arith.constant 0 : index
      %c0_27 = arith.constant 0 : index
      %51 = vector.load %arg9[%c0_26, %c0_27] : memref<1x32xf32, #tpu.memory_space<vmem>>, vector<1x32xf32>
      %52 = vector.broadcast %51 : vector<1x32xf32> to vector<8x32xf32>
      %53 = arith.addf %50, %52 : vector<8x32xf32>
      %c0_28 = arith.constant 0 : index
      %c0_29 = arith.constant 0 : index
      %c0_30 = arith.constant 0 : index
      %54 = vector.load %arg10[%c0_28, %c0_29, %c0_30] : memref<1x8x32xf32, #tpu.memory_space<vmem>>, vector<1x8x32xf32>
      %55 = vector.shape_cast %54 : vector<1x8x32xf32> to vector<8x32xf32>
      %56 = vector.shape_cast %53 : vector<8x32xf32> to vector<1x8x32xf32>
      tpu.vector_store %arg10[%c0_28, %c0_29, %c0_30], %56 {strides = array<i32>} : memref<1x8x32xf32, #tpu.memory_space<vmem>>, vector<1x8x32xf32>,
    } else {
    }
    return
  }
  func.func @transform_0(%arg0: i32, %arg1: i32) -> (i32, i32, i32) {
    %c0_i32 = arith.constant 0 : i32
    %c0_i32_0 = arith.constant 0 : i32
    %c0_i32_1 = arith.constant 0 : i32
    return %arg0, %c0_i32, %c0_i32_0 : i32, i32, i32
  }
  func.func @transform_1(%arg0: i32, %arg1: i32) -> (i32, i32, i32) {
    %c0_i32 = arith.constant 0 : i32
    %c0_i32_0 = arith.constant 0 : i32
    %c0_i32_1 = arith.constant 0 : i32
    return %arg0, %c0_i32, %c0_i32_0 : i32, i32, i32
  }
  func.func @transform_2(%arg0: i32, %arg1: i32) -> (i32, i32) {
    %c0_i32 = arith.constant 0 : i32
    %c0_i32_0 = arith.constant 0 : i32
    %c0_i32_1 = arith.constant 0 : i32
    return %c0_i32, %c0_i32_0 : i32, i32
  }
  func.func @transform_3(%arg0: i32, %arg1: i32) -> (i32, i32) {
    %c0_i32 = arith.constant 0 : i32
    %c0_i32_0 = arith.constant 0 : i32
    %c0_i32_1 = arith.constant 0 : i32
    return %c0_i32, %c0_i32_0 : i32, i32
  }
  func.func @transform_4(%arg0: i32, %arg1: i32) -> (i32, i32, i32) {
    %c0_i32 = arith.constant 0 : i32
    %c0_i32_0 = arith.constant 0 : i32
    %c0_i32_1 = arith.constant 0 : i32
    %c0_i32_2 = arith.constant 0 : i32
    return %c0_i32, %c0_i32_0, %c0_i32_1 : i32, i32, i32
  }
  func.func @transform_5(%arg0: i32, %arg1: i32) -> (i32, i32, i32) {
    %c0_i32 = arith.constant 0 : i32
    %c0_i32_0 = arith.constant 0 : i32
    %c0_i32_1 = arith.constant 0 : i32
    %c0_i32_2 = arith.constant 0 : i32
    return %c0_i32, %c0_i32_0, %c0_i32_1 : i32, i32, i32
  }
  func.func @transform_6(%arg0: i32, %arg1: i32) -> (i32, i32, i32) {
    %c0_i32 = arith.constant 0 : i32
    %c0_i32_0 = arith.constant 0 : i32
    %c0_i32_1 = arith.constant 0 : i32
    %c0_i32_2 = arith.constant 0 : i32
    return %c0_i32, %c0_i32_0, %c0_i32_1 : i32, i32, i32
  }
  func.func @transform_7(%arg0: i32, %arg1: i32) -> (i32, i32) {
    %c0_i32 = arith.constant 0 : i32
    %c0_i32_0 = arith.constant 0 : i32
    %c0_i32_1 = arith.constant 0 : i32
    return %c0_i32, %c0_i32_0 : i32, i32
  }
  func.func @transform_8(%arg0: i32, %arg1: i32) -> (i32, i32, i32) {
    %c0_i32 = arith.constant 0 : i32
    %c0_i32_0 = arith.constant 0 : i32
    %c0_i32_1 = arith.constant 0 : i32
    return %arg0, %c0_i32, %c0_i32_0 : i32, i32, i32
  }
}

</mosaic_0001>

<llo_original>
// kernel: tpu_custom_call.1
$region0: #{tpu_custom_call.1}
  #allocation0 [shape = 'u32[]', space=smem, size = 0x4, offset = 0x4, fixed_abs, tag = 'smem constant byte address 0x4 - core index']
  #allocation1 [shape = 'u32[144,128]{1,0:T(1,128)}', space=vmem, size = 0x12000, scoped, tag = 'internal scratch']
  #allocation2 [shape = 'bf16[8,32]{1,0:T(8,128)(2,1)}', space=vmem, size = 0x800, scoped, tag = 'scratch operand']
  #allocation3 [shape = 'f32[8,32]{1,0:T(8,128)}', space=vmem, size = 0x1000, scoped, tag = 'scratch operand']
  %s0 = inlined_call_operand.vmem [shape: f32[2,8,32], index: 0, kind: input, shape index: {}]
  %s1 = inlined_call_operand.vmem [shape: f32[2,1,8], index: 1, kind: input, shape index: {}]
  %s2 = inlined_call_operand.vmem [shape: f32[1,32], index: 2, kind: input, shape index: {}]
  %s3 = inlined_call_operand.vmem [shape: f32[1,32], index: 3, kind: input, shape index: {}]
  %s4 = inlined_call_operand.vmem [shape: bf16[4,32,24], index: 4, kind: input, shape index: {}]
  %s5 = inlined_call_operand.vmem [shape: f32[4,1,24], index: 5, kind: input, shape index: {}]
  %s6 = inlined_call_operand.vmem [shape: bf16[4,8,32], index: 6, kind: input, shape index: {}]
  %s7 = inlined_call_operand.vmem [shape: f32[1,32], index: 7, kind: input, shape index: {}]
  %s8 = inlined_call_operand.hbm [shape: f32[2,8,32], index: 8, kind: output, shape index: {}]
  %s9 = sld [smem:[#allocation0]]
  $region73: #{tpu_custom_call.1} parent=0
    _
  %s11 = ssub.s32 1, %s9
  %s12 = scalar_select 0, %s11, %s9
  $region1: #{tpu_custom_call.1} parent=0
    #allocation4 [shape = 'u8[8192]{0}', space=vmem, size = 0x2000, scoped, tag = 'output window, operand 0']
    #allocation5 [shape = 's32[2]{0}', space=sflag, size = 0x8, scoped, tag = 'scoped memory for tpu_custom_call.1']
    %13 = vsyncpa [#allocation5], 0
    %s14 = scalar_lea.sflag [#allocation5], 1
    %15 = vsyncpa %s14, 0
    loop: start=0, step=1, limit=10
    $region2: #{tpu_custom_call.1} parent=1 // loop_pre_header
      _
    $region3: #{tpu_custom_call.1} parent=1 // loop_header
      %s17 = sphi 0, %s21
      %p18 = scmp.ge.s32.totalorder %s17, 10
      %s24 = sphi 0, %s36
      %s25 = sphi 0, %s32
      %s26 = sphi 0, %s24
      %s27 = sphi 0, %s25
      %s28 = sphi 0, %s26
      %s29 = sphi 0, %s27
      %s39 = sphi 0, %s41
      %s42 = sphi 0, %s39
      %s43 = sphi 0, %s42
      %s59 = sphi 0, %s43
      %s65 = sphi 0, %s67
      %s68 = sphi 0, %s65
      %s69 = sphi 0, %s68
      %s85 = sphi 0, %s69
      %s89 = sphi 0, %s89
      %s91 = sphi 0, %s89
      %s92 = sphi 0, %s91
      %s106 = sphi 0, %s92
      %s110 = sphi 0, %s110
      %s112 = sphi 0, %s110
      %s113 = sphi 0, %s112
      %s127 = sphi 0, %s113
      %s131 = sphi 0, %s131
      %s133 = sphi 0, %s131
      %s134 = sphi 0, %s133
      %s148 = sphi 0, %s134
      %s152 = sphi 0, %s152
      %s154 = sphi 0, %s152
      %s155 = sphi 0, %s154
      %s169 = sphi 0, %s155
      %s173 = sphi 0, %s173
      %s175 = sphi 0, %s173
      %s176 = sphi 0, %s175
      %s190 = sphi 0, %s176
      %s194 = sphi 0, %s194
      %s196 = sphi 0, %s194
      %s197 = sphi 0, %s196
      %s211 = sphi 0, %s197
      %s217 = sphi 0, %s219
      %s220 = sphi 0, %s217
      %s221 = sphi 0, %s220
      %s237 = sphi 0, %s221
    $region4: #{tpu_custom_call.1} parent=1 // loop_header_branch
      %20 = sbr.rel (%p18) target = $region8
    $region5: #{tpu_custom_call.1} parent=1 // loop_body
      %s22 = ssub.s32 %s17, 1
      %s23 = ssub.s32 %s17, 2
      %s30 = sadd.s32 1, %s25
      %p31 = scmp.ge.s32.totalorder %s30, 4
      %s32 = scalar_select %p31, 0, %s30
      %s33 = sadd.s32 1, %s24
      %s34 = scalar_select %p31, %s33, %s24
      %p35 = scmp.ge.s32.totalorder %s34, 2
      %s36 = scalar_select %p35, 0, %s34
      %s37 = ssub.s32 %s24, %s36
      %p38 = scmp.eq.s32.totalorder %s37, 0
      %s40 = sadd.s32 %s39, 1
      %s41 = scalar_select %p38, %s39, %s40
      %p44 = pneg %p38
      %p45 = scmp.eq.s32.totalorder %s17, 7
      %p46 = por %p44, %p45
      %p47 = scmp.ne.s32.totalorder %s39, %s42
      %p48 = scmp.eq.s32.totalorder %s17, 0
      %p49 = por %p47, %p48
      %p50 = scmp.ne.s32.totalorder %s39, %s42
      %p51 = scmp.eq.s32.totalorder %s22, 7
      %p52 = por %p50, %p51
      %p53 = scmp.ne.s32.totalorder %s42, %s43
      %p54 = scmp.eq.s32.totalorder %s22, 0
      %p55 = por %p53, %p54
      %p56 = scmp.ne.s32.totalorder %s42, %s43
      %p57 = scmp.eq.s32.totalorder %s23, 7
      %p58 = por %p56, %p57
      %p60 = scmp.ne.s32.totalorder %s43, %s59
      %p61 = scmp.eq.s32.totalorder %s23, 0
      %p62 = por %p60, %p61
      %s63 = ssub.s32 %s24, %s36
      %p64 = scmp.eq.s32.totalorder %s63, 0
      %s66 = sadd.s32 %s65, 1
      %s67 = scalar_select %p64, %s65, %s66
      %p70 = pneg %p64
      %p71 = scmp.eq.s32.totalorder %s17, 7
      %p72 = por %p70, %p71
      %p73 = scmp.ne.s32.totalorder %s65, %s68
      %p74 = scmp.eq.s32.totalorder %s17, 0
      %p75 = por %p73, %p74
      %p76 = scmp.ne.s32.totalorder %s65, %s68
      %p77 = scmp.eq.s32.totalorder %s22, 7
      %p78 = por %p76, %p77
      %p79 = scmp.ne.s32.totalorder %s68, %s69
      %p80 = scmp.eq.s32.totalorder %s22, 0
      %p81 = por %p79, %p80
      %p82 = scmp.ne.s32.totalorder %s68, %s69
      %p83 = scmp.eq.s32.totalorder %s23, 7
      %p84 = por %p82, %p83
      %p86 = scmp.ne.s32.totalorder %s69, %s85
      %p87 = scmp.eq.s32.totalorder %s23, 0
      %p88 = por %p86, %p87
      %s90 = sadd.s32 %s89, 1
      %p93 = scmp.eq.s32.totalorder %s17, 7
      %p94 = scmp.ne.s32.totalorder %s89, %s91
      %p95 = scmp.eq.s32.totalorder %s17, 0
      %p96 = por %p94, %p95
      %p97 = scmp.ne.s32.totalorder %s89, %s91
      %p98 = scmp.eq.s32.totalorder %s22, 7
      %p99 = por %p97, %p98
      %p100 = scmp.ne.s32.totalorder %s91, %s92
      %p101 = scmp.eq.s32.totalorder %s22, 0
      %p102 = por %p100, %p101
      %p103 = scmp.ne.s32.totalorder %s91, %s92
      %p104 = scmp.eq.s32.totalorder %s23, 7
      %p105 = por %p103, %p104
      %p107 = scmp.ne.s32.totalorder %s92, %s106
      %p108 = scmp.eq.s32.totalorder %s23, 0
      %p109 = por %p107, %p108
      %s111 = sadd.s32 %s110, 1
      %p114 = scmp.eq.s32.totalorder %s17, 7
      %p115 = scmp.ne.s32.totalorder %s110, %s112
      %p116 = scmp.eq.s32.totalorder %s17, 0
      %p117 = por %p115, %p116
      %p118 = scmp.ne.s32.totalorder %s110, %s112
      %p119 = scmp.eq.s32.totalorder %s22, 7
      %p120 = por %p118, %p119
      %p121 = scmp.ne.s32.totalorder %s112, %s113
      %p122 = scmp.eq.s32.totalorder %s22, 0
      %p123 = por %p121, %p122
      %p124 = scmp.ne.s32.totalorder %s112, %s113
      %p125 = scmp.eq.s32.totalorder %s23, 7
      %p126 = por %p124, %p125
      %p128 = scmp.ne.s32.totalorder %s113, %s127
      %p129 = scmp.eq.s32.totalorder %s23, 0
      %p130 = por %p128, %p129
      %s132 = sadd.s32 %s131, 1
      %p135 = scmp.eq.s32.totalorder %s17, 7
      %p136 = scmp.ne.s32.totalorder %s131, %s133
      %p137 = scmp.eq.s32.totalorder %s17, 0
      %p138 = por %p136, %p137
      %p139 = scmp.ne.s32.totalorder %s131, %s133
      %p140 = scmp.eq.s32.totalorder %s22, 7
      %p141 = por %p139, %p140
      %p142 = scmp.ne.s32.totalorder %s133, %s134
      %p143 = scmp.eq.s32.totalorder %s22, 0
      %p144 = por %p142, %p143
      %p145 = scmp.ne.s32.totalorder %s133, %s134
      %p146 = scmp.eq.s32.totalorder %s23, 7
      %p147 = por %p145, %p146
      %p149 = scmp.ne.s32.totalorder %s134, %s148
      %p150 = scmp.eq.s32.totalorder %s23, 0
      %p151 = por %p149, %p150
      %s153 = sadd.s32 %s152, 1
      %p156 = scmp.eq.s32.totalorder %s17, 7
      %p157 = scmp.ne.s32.totalorder %s152, %s154
      %p158 = scmp.eq.s32.totalorder %s17, 0
      %p159 = por %p157, %p158
      %p160 = scmp.ne.s32.totalorder %s152, %s154
      %p161 = scmp.eq.s32.totalorder %s22, 7
      %p162 = por %p160, %p161
      %p163 = scmp.ne.s32.totalorder %s154, %s155
      %p164 = scmp.eq.s32.totalorder %s22, 0
      %p165 = por %p163, %p164
      %p166 = scmp.ne.s32.totalorder %s154, %s155
      %p167 = scmp.eq.s32.totalorder %s23, 7
      %p168 = por %p166, %p167
      %p170 = scmp.ne.s32.totalorder %s155, %s169
      %p171 = scmp.eq.s32.totalorder %s23, 0
      %p172 = por %p170, %p171
      %s174 = sadd.s32 %s173, 1
      %p177 = scmp.eq.s32.totalorder %s17, 7
      %p178 = scmp.ne.s32.totalorder %s173, %s175
      %p179 = scmp.eq.s32.totalorder %s17, 0
      %p180 = por %p178, %p179
      %p181 = scmp.ne.s32.totalorder %s173, %s175
      %p182 = scmp.eq.s32.totalorder %s22, 7
      %p183 = por %p181, %p182
      %p184 = scmp.ne.s32.totalorder %s175, %s176
      %p185 = scmp.eq.s32.totalorder %s22, 0
      %p186 = por %p184, %p185
      %p187 = scmp.ne.s32.totalorder %s175, %s176
      %p188 = scmp.eq.s32.totalorder %s23, 7
      %p189 = por %p187, %p188
      %p191 = scmp.ne.s32.totalorder %s176, %s190
      %p192 = scmp.eq.s32.totalorder %s23, 0
      %p193 = por %p191, %p192
      %s195 = sadd.s32 %s194, 1
      %p198 = scmp.eq.s32.totalorder %s17, 7
      %p199 = scmp.ne.s32.totalorder %s194, %s196
      %p200 = scmp.eq.s32.totalorder %s17, 0
      %p201 = por %p199, %p200
      %p202 = scmp.ne.s32.totalorder %s194, %s196
      %p203 = scmp.eq.s32.totalorder %s22, 7
      %p204 = por %p202, %p203
      %p205 = scmp.ne.s32.totalorder %s196, %s197
      %p206 = scmp.eq.s32.totalorder %s22, 0
      %p207 = por %p205, %p206
      %p208 = scmp.ne.s32.totalorder %s196, %s197
      %p209 = scmp.eq.s32.totalorder %s23, 7
      %p210 = por %p208, %p209
      %p212 = scmp.ne.s32.totalorder %s197, %s211
      %p213 = scmp.eq.s32.totalorder %s23, 0
      %p214 = por %p212, %p213
      %s215 = ssub.s32 %s24, %s36
      %p216 = scmp.eq.s32.totalorder %s215, 0
      %s218 = sadd.s32 %s217, 1
      %s219 = scalar_select %p216, %s217, %s218
      %p222 = pneg %p216
      %p223 = scmp.eq.s32.totalorder %s17, 7
      %p224 = por %p222, %p223
      %p225 = scmp.ne.s32.totalorder %s217, %s220
      %p226 = scmp.eq.s32.totalorder %s17, 0
      %p227 = por %p225, %p226
      %p228 = scmp.ne.s32.totalorder %s217, %s220
      %p229 = scmp.eq.s32.totalorder %s22, 7
      %p230 = por %p228, %p229
      %p231 = scmp.ne.s32.totalorder %s220, %s221
      %p232 = scmp.eq.s32.totalorder %s22, 0
      %p233 = por %p231, %p232
      %p234 = scmp.ne.s32.totalorder %s220, %s221
      %p235 = scmp.eq.s32.totalorder %s23, 7
      %p236 = por %p234, %p235
      %p238 = scmp.ne.s32.totalorder %s221, %s237
      %p239 = scmp.eq.s32.totalorder %s23, 0
      %p240 = por %p238, %p239
      %p241 = scmp.le.s32.totalorder 1, %s17
      %p242 = scmp.lt.s32.totalorder %s17, 9
      %p243 = pnand %p241, %p242
      %p244 = pneg %p243
      // Predicated region
      $region9: #{tpu_custom_call.1} parent=5 // pred_check
        _
      $region10: #{tpu_custom_call.1} parent=5 // pred_check_branch
        %246 = sbr.rel (%p243) target = $region12
      $region11: #{tpu_custom_call.1} parent=5 // pred_region
        %s247 = ssub.s32 %s17, 1
        // Predicated region
        $region13: #{tpu_custom_call.1} parent=11 // pred_check
          %p248 = pneg %p102
        $region14: #{tpu_custom_call.1} parent=11 // pred_check_branch
          %250 = sbr.rel (%p248) target = $region16
        $region15: #{tpu_custom_call.1} parent=11 // pred_region
          _
        $region16: #{tpu_custom_call.1} parent=11 // pred_fallthru
          _
        // Predicated region
        $region17: #{tpu_custom_call.1} parent=11 // pred_check
          %p251 = pneg %p123
        $region18: #{tpu_custom_call.1} parent=11 // pred_check_branch
          %253 = sbr.rel (%p251) target = $region20
        $region19: #{tpu_custom_call.1} parent=11 // pred_region
          _
        $region20: #{tpu_custom_call.1} parent=11 // pred_fallthru
          _
        // Predicated region
        $region21: #{tpu_custom_call.1} parent=11 // pred_check
          %p254 = pneg %p144
        $region22: #{tpu_custom_call.1} parent=11 // pred_check_branch
          %256 = sbr.rel (%p254) target = $region24
        $region23: #{tpu_custom_call.1} parent=11 // pred_region
          _
        $region24: #{tpu_custom_call.1} parent=11 // pred_fallthru
          _
        // Predicated region
        $region25: #{tpu_custom_call.1} parent=11 // pred_check
          %p257 = pneg %p165
        $region26: #{tpu_custom_call.1} parent=11 // pred_check_branch
          %259 = sbr.rel (%p257) target = $region28
        $region27: #{tpu_custom_call.1} parent=11 // pred_region
          _
        $region28: #{tpu_custom_call.1} parent=11 // pred_fallthru
          _
        // Predicated region
        $region29: #{tpu_custom_call.1} parent=11 // pred_check
          %p260 = pneg %p186
        $region30: #{tpu_custom_call.1} parent=11 // pred_check_branch
          %262 = sbr.rel (%p260) target = $region32
        $region31: #{tpu_custom_call.1} parent=11 // pred_region
          _
        $region32: #{tpu_custom_call.1} parent=11 // pred_fallthru
          _
        // Predicated region
        $region33: #{tpu_custom_call.1} parent=11 // pred_check
          %p263 = pneg %p207
        $region34: #{tpu_custom_call.1} parent=11 // pred_check_branch
          %265 = sbr.rel (%p263) target = $region36
        $region35: #{tpu_custom_call.1} parent=11 // pred_region
          _
        $region36: #{tpu_custom_call.1} parent=11 // pred_fallthru
          _
      $region12: #{tpu_custom_call.1} parent=5 // pred_fallthru
        _
      %p266 = scmp.lt.s32.totalorder %s17, 8
      // Predicated region
      $region37: #{tpu_custom_call.1} parent=5 // pred_check
        %p267 = pneg %p266
      $region38: #{tpu_custom_call.1} parent=5 // pred_check_branch
        %269 = sbr.rel (%p267) target = $region40
      $region39: #{tpu_custom_call.1} parent=5 // pred_region
        // Predicated region
        $region41: #{tpu_custom_call.1} parent=39 // pred_check
          %p270 = pneg %p49
        $region42: #{tpu_custom_call.1} parent=39 // pred_check_branch
          %272 = sbr.rel (%p270) target = $region44
        $region43: #{tpu_custom_call.1} parent=39 // pred_region
          %p273 = scmp.lt.s32.totalorder %s24, 1
          %s274 = scalar_select %p273, %s24, 1
          %s275 = smul.addr %s274, 8
          %s276 = scalar_lea.vmem %s0, %s275
        $region44: #{tpu_custom_call.1} parent=39 // pred_fallthru
          _
        // Predicated region
        $region45: #{tpu_custom_call.1} parent=39 // pred_check
          %p277 = pneg %p75
        $region46: #{tpu_custom_call.1} parent=39 // pred_check_branch
          %279 = sbr.rel (%p277) target = $region48
        $region47: #{tpu_custom_call.1} parent=39 // pred_region
          %p280 = scmp.lt.s32.totalorder %s24, 1
          %s281 = scalar_select %p280, %s24, 1
          %s282 = scalar_lea.vmem %s1, %s281
        $region48: #{tpu_custom_call.1} parent=39 // pred_fallthru
          _
      $region40: #{tpu_custom_call.1} parent=5 // pred_fallthru
        _
      %p283 = scmp.le.s32.totalorder 1, %s17
      %p284 = scmp.lt.s32.totalorder %s17, 9
      %p285 = pnand %p283, %p284
      %p286 = pneg %p285
      // Predicated region
      $region49: #{tpu_custom_call.1} parent=5 // pred_check
        _
      $region50: #{tpu_custom_call.1} parent=5 // pred_check_branch
        %288 = sbr.rel (%p285) target = $region52
      $region51: #{tpu_custom_call.1} parent=5 // pred_region
        %s289 = ssub.s32 %s17, 1
        %p290 = scmp.lt.s32.totalorder %s26, 1
        %s291 = scalar_select %p290, %s26, 1
        %s292 = smul.addr %s291, 8
        %s293 = scalar_lea.vmem %s0, %s292
        %p294 = pneg %p55
        %p295 = pneg %p52
        %p296 = scmp.lt.s32.totalorder %s26, 1
        %s297 = scalar_select %p296, %s26, 1
        %s298 = scalar_lea.vmem %s1, %s297
        %p299 = pneg %p81
        %p300 = pneg %p78
        %p301 = pneg %p102
        %p302 = pneg %p99
        %p303 = pneg %p123
        %p304 = pneg %p120
        %p305 = pneg %p144
        %p306 = pneg %p141
        %p307 = pneg %p165
        %p308 = pneg %p162
        %p309 = pneg %p186
        %p310 = pneg %p183
        %p311 = pneg %p207
        %p312 = pneg %p204
        %p313 = pneg %p233
        %p314 = pneg %p230
        %s315 = sand.u32 %s220, 1
        %s316 = scalar_lea.sflag [#allocation5], %s315
        %s317 = sand.u32 %s220, 1
        %s318 = smul.addr %s317, 8
        %s319 = scalar_lea.vmem [#allocation4], %s318
        %p320 = scmp.lt.s32.totalorder %s26, 1
        %s321 = scalar_select %p320, %s26, 1
        %s322 = smul.addr %s321, 8
        %s323 = scalar_lea.vmem %s0, %s322
        %p324 = scmp.lt.s32.totalorder %s26, 1
        %s325 = scalar_select %p324, %s26, 1
        %s326 = scalar_lea.vmem %s1, %s325
        %p328 = scmp.eq.s32.totalorder %s27, 0
        // Predicated region
        $region53: #{tpu_custom_call.1} parent=51 // pred_check
          %p329 = pneg %p328
        $region54: #{tpu_custom_call.1} parent=51 // pred_check_branch
          %331 = sbr.rel (%p329) target = $region56
        $region55: #{tpu_custom_call.1} parent=51 // pred_region
          %v332 = vld [vmem:[%s323] sm:$0xff]
          %v333 = vld [vmem:[%s2] sm:$0x1]
          %v334 = vld [vmem:[%s3] sm:$0x1]
          %vm335 = vcmask 261120
          %v336 = vsel %vm335, %v332, 0.0
          %337 = vadd.xlane.f32.xlu0 %v336
          %v338 = vpop.xlane.xlu0 %337
          %v339 = vrcp.pop 32.0
          %v340 = vmul.f32 %v338, %v339
          %v341 = vsub.f32 %v332, %v340
          %v342 = vmul.f32 %v341, %v341
          %v343 = vsel %vm335, %v342, 0.0
          %344 = vadd.xlane.f32.xlu0 %v343
          %v345 = vpop.xlane.xlu0 %344
          %v346 = vmul.f32 %v345, 0.032258064
          %v347 = vrsqrt.pop %v346
          %v348 = vmul.f32 %v346, %v347
          %vm349 = vcmp.eq.f32.partialorder %v346, inf
          %v350 = vsel %vm349, %v346, %v348
          %vm351 = vcmp.eq.f32.partialorder %v346, 0.0
          %v352 = vand.u32 %v346, 2147483648
          %v353 = vsel %vm351, %v352, %v350
          %v354 = vadd.f32 %v353, 1e-06
          %v355 = vrcp.pop %v354
          %v356 = vmul.f32 1.0, %v355
          %v358 = vlaneseq
          %v359 = vshrl.u32 %v358, 7
          %v360 = vsub.s32 0, %v359
          %v361 = vrot.slane %v333, %v360
          %v363 = vmul.f32 %v361, %v341
          %v364 = vmul.f32 %v363, %v356
          %v366 = vlaneseq
          %v367 = vshrl.u32 %v366, 7
          %v368 = vsub.s32 0, %v367
          %v369 = vrot.slane %v334, %v368
          %v371 = vadd.f32 %v364, %v369
          %v372 = vpack.c.bf16 %v371, %v371
          %vm373 = vcmask 257024
          %374 = vst.msk [vmem:[#allocation2] sm:$0xf] %vm373, %v372
          %375 = vst.msk [vmem:[#allocation3] sm:$0xff] %vm335, 0.0
        $region56: #{tpu_custom_call.1} parent=51 // pred_fallthru
          _
        %s376 = smul.u32 %s27, 4
        %s377 = smul.addr %s376, 4
        %s378 = scalar_lea.vmem %s4, %s377
        %v379 = vld [vmem:[%s378] sm:$0xf]
        %v380 = vld [vmem:[%s378 + $0x4] sm:$0xf]
        %v381 = vld [vmem:[%s378 + $0x8] sm:$0xf]
        %v382 = vld [vmem:[%s378 + $0xc] sm:$0xf]
        %s383 = scalar_lea.vmem %s5, %s27
        %v384 = vld [vmem:[%s383] sm:$0x1]
        %s385 = smul.addr %s27, 4
        %s386 = scalar_lea.vmem %s6, %s385
        %v387 = vld [vmem:[%s386] sm:$0xf]
        %v388 = vld [vmem:[#allocation2] sm:$0xf]
        %v390 = vlaneseq
        %v391 = vshrl.u32 %v390, 7
        %v392 = vsub.s32 0, %v391
        %v393 = vrot.slane %v384, %v392
        %v399 = vunpack.c.l.b16 %v379
        %v400 = vunpack.c.l.b16 %v380
        %v401 = vunpack.c.l.b16 %v381
        %v402 = vunpack.c.l.b16 %v382
        %v403 = vpack.c.b16 %v400, %v399
        %v404 = vpack.c.b16 %v402, %v401
        %vm407 = vcmask 261120
        %v409 = vsel %vm407, %v388, 0
        %411 = vmatprep.subr.bf16.mxu0 0
        %412 = vmatpush1.bf16.msra.mxu0 %v403
        %413 = vmatprep.subr.bf16.mxu0 0
        %414 = vmatpush1.bf16.msra.mxu0 %v404
        %415 = vmatprep.subr.bf16.mxu0 0
        %416 = vmatpush1.bf16.msra.mxu0 0
        %417 = vmatprep.subr.bf16.mxu0 0
        %418 = vmatpush1.bf16.msra.mxu0 0
        %419 = vmatprep.subr.bf16.mxu0 0
        %420 = vmatpush1.bf16.msra.mxu0 0
        %421 = vmatprep.subr.bf16.mxu0 0
        %422 = vmatpush1.bf16.msra.mxu0 0
        %423 = vmatprep.subr.bf16.mxu0 0
        %424 = vmatpush1.bf16.msra.mxu0 0
        %425 = vmatprep.subr.bf16.mxu0 0
        %426 = vmatpush1.bf16.msra.mxu0 0
        %427 = vmatprep.subr.bf16.mxu0 0
        %428 = vmatpush1.bf16.msra.mxu0 0
        %429 = vmatprep.subr.bf16.mxu0 0
        %430 = vmatpush1.bf16.msra.mxu0 0
        %431 = vmatprep.subr.bf16.mxu0 0
        %432 = vmatpush1.bf16.msra.mxu0 0
        %433 = vmatprep.subr.bf16.mxu0 0
        %434 = vmatpush1.bf16.msra.mxu0 0
        %435 = vmatprep.subr.bf16.mxu0 0
        %436 = vmatpush1.bf16.msra.mxu0 0
        %437 = vmatprep.subr.bf16.mxu0 0
        %438 = vmatpush1.bf16.msra.mxu0 0
        %439 = vmatprep.subr.bf16.mxu0 0
        %440 = vmatpush1.bf16.msra.mxu0 0
        %441 = vmatprep.subr.bf16.mxu0 0
        %442 = vmatpush1.bf16.msra.mxu0 0
        %443 = vmatprep.mubr.bf16.mxu0 0
        %444 = vmatmul.mubr.bf16.gmra.mrb[0].mxu0 %v409
        %v445 = vpop.f32.mrb[0].mxu0
        %v446 = vadd.f32 %v393, %v445
        %v447 = vpop.f32.mrb[0].mxu0
        %v448 = vpop.f32.mrb[0].mxu0
        %v449 = vpop.f32.mrb[0].mxu0
        %450 = vdwg.mxu0
        %v451 = vpack.c.bf16 %v446, %v446
        %v452 = vld [vmem:[%s326] sm:$0x1]
        %v454 = vlaneseq
        %v455 = vshrl.u32 %v454, 7
        %v456 = vsub.s32 0, %v455
        %v457 = vrot.slane %v452, %v456
        %460 = vrot.lane.b32.xlu0 %v451, 120
        %v461 = vpop.permute.xlu0 %460
        %vm462 = vcmask 64512
        %v464 = vsel %vm462, %v451, 0
        %v467 = vsel %vm462, %v461, 0
        %469 = vmatprep.subr.bf16.mxu0 0
        %470 = vmatpush1.bf16.xpose.msra.mxu0 %v467
        %471 = vmatprep.subr.bf16.mxu0 0
        %472 = vmatpush1.bf16.xpose.msra.mxu0 0
        %473 = vmatprep.subr.bf16.mxu0 0
        %474 = vmatpush1.bf16.xpose.msra.mxu0 0
        %475 = vmatprep.subr.bf16.mxu0 0
        %476 = vmatpush1.bf16.xpose.msra.mxu0 0
        %477 = vmatprep.subr.bf16.mxu0 0
        %478 = vmatpush1.bf16.xpose.msra.mxu0 0
        %479 = vmatprep.subr.bf16.mxu0 0
        %480 = vmatpush1.bf16.xpose.msra.mxu0 0
        %481 = vmatprep.subr.bf16.mxu0 0
        %482 = vmatpush1.bf16.xpose.msra.mxu0 0
        %483 = vmatprep.subr.bf16.mxu0 0
        %484 = vmatpush1.bf16.xpose.msra.mxu0 0
        %485 = vmatprep.subr.bf16.mxu0 0
        %486 = vmatpush1.bf16.xpose.msra.mxu0 0
        %487 = vmatprep.subr.bf16.mxu0 0
        %488 = vmatpush1.bf16.xpose.msra.mxu0 0
        %489 = vmatprep.subr.bf16.mxu0 0
        %490 = vmatpush1.bf16.xpose.msra.mxu0 0
        %491 = vmatprep.subr.bf16.mxu0 0
        %492 = vmatpush1.bf16.xpose.msra.mxu0 0
        %493 = vmatprep.subr.bf16.mxu0 0
        %494 = vmatpush1.bf16.xpose.msra.mxu0 0
        %495 = vmatprep.subr.bf16.mxu0 0
        %496 = vmatpush1.bf16.xpose.msra.mxu0 0
        %497 = vmatprep.subr.bf16.mxu0 0
        %498 = vmatpush1.bf16.xpose.msra.mxu0 0
        %499 = vmatprep.subr.bf16.mxu0 0
        %500 = vmatpush1.bf16.xpose.msra.mxu0 0
        %501 = vmatprep.mubr.bf16.mxu0 0
        %502 = vmatmul.mubr.bf16.gmra.mrb[0].mxu0 %v464
        %v503 = vpop.f32.mrb[0].mxu0
        %v504 = vadd.f32 %v457, %v503
        %v505 = vpop.f32.mrb[0].mxu0
        %v506 = vpop.f32.mrb[0].mxu0
        %v507 = vpop.f32.mrb[0].mxu0
        %508 = vdwg.mxu0
        %v509 = vsel %vm462, %v504, -inf
        %510 = vmax.xlane.f32.xlu0 %v509
        %v511 = vpop.xlane.xlu0 %510
        %v512 = vsub.f32 %v504, %v511
        %v513 = vmul.f32 %v512, 1.442695
        %v514 = vpow.pop %v513
        %v515 = vsel %vm462, %v514, 0.0
        %516 = vadd.xlane.f32.xlu0 %v515
        %v517 = vpop.xlane.xlu0 %516
        %v518 = vrcp.pop %v517
        %v519 = vmul.f32 %v514, %v518
        %v520 = vpack.c.bf16 %v519, %v519
        %521 = vrot.lane.b32.xlu0 %v451, 112
        %v522 = vpop.permute.xlu0 %521
        %v524 = vsel %vm462, %v520, 0
        %vm526 = vcmask 1043456
        %v528 = vsel %vm526, %v522, 0
        %530 = vmatprep.subr.bf16.mxu0 0
        %531 = vmatpush1.bf16.msra.mxu0 %v528
        %532 = vmatprep.subr.bf16.mxu0 0
        %533 = vmatpush1.bf16.msra.mxu0 0
        %534 = vmatprep.subr.bf16.mxu0 0
        %535 = vmatpush1.bf16.msra.mxu0 0
        %536 = vmatprep.subr.bf16.mxu0 0
        %537 = vmatpush1.bf16.msra.mxu0 0
        %538 = vmatprep.subr.bf16.mxu0 0
        %539 = vmatpush1.bf16.msra.mxu0 0
        %540 = vmatprep.subr.bf16.mxu0 0
        %541 = vmatpush1.bf16.msra.mxu0 0
        %542 = vmatprep.subr.bf16.mxu0 0
        %543 = vmatpush1.bf16.msra.mxu0 0
        %544 = vmatprep.subr.bf16.mxu0 0
        %545 = vmatpush1.bf16.msra.mxu0 0
        %546 = vmatprep.subr.bf16.mxu0 0
        %547 = vmatpush1.bf16.msra.mxu0 0
        %548 = vmatprep.subr.bf16.mxu0 0
        %549 = vmatpush1.bf16.msra.mxu0 0
        %550 = vmatprep.subr.bf16.mxu0 0
        %551 = vmatpush1.bf16.msra.mxu0 0
        %552 = vmatprep.subr.bf16.mxu0 0
        %553 = vmatpush1.bf16.msra.mxu0 0
        %554 = vmatprep.subr.bf16.mxu0 0
        %555 = vmatpush1.bf16.msra.mxu0 0
        %556 = vmatprep.subr.bf16.mxu0 0
        %557 = vmatpush1.bf16.msra.mxu0 0
        %558 = vmatprep.subr.bf16.mxu0 0
        %559 = vmatpush1.bf16.msra.mxu0 0
        %560 = vmatprep.subr.bf16.mxu0 0
        %561 = vmatpush1.bf16.msra.mxu0 0
        %562 = vmatprep.mubr.bf16.mxu0 0
        %563 = vmatmul.mubr.bf16.gmra.mrb[0].mxu0 %v524
        %v564 = vpop.f32.mrb[0].mxu0
        %v565 = vadd.f32 0.0, %v564
        %v566 = vpop.f32.mrb[0].mxu0
        %v567 = vpop.f32.mrb[0].mxu0
        %v568 = vpop.f32.mrb[0].mxu0
        %569 = vdwg.mxu0
        %v570 = vld [vmem:[#allocation3] sm:$0xff]
        %v571 = vpack.c.bf16 %v565, %v565
        %v573 = vsel %vm462, %v571, 0
        %v576 = vsel %vm526, %v387, 0
        %578 = vmatprep.subr.bf16.mxu0 0
        %579 = vmatpush1.bf16.msra.mxu0 %v576
        %580 = vmatprep.subr.bf16.mxu0 0
        %581 = vmatpush1.bf16.msra.mxu0 0
        %582 = vmatprep.subr.bf16.mxu0 0
        %583 = vmatpush1.bf16.msra.mxu0 0
        %584 = vmatprep.subr.bf16.mxu0 0
        %585 = vmatpush1.bf16.msra.mxu0 0
        %586 = vmatprep.subr.bf16.mxu0 0
        %587 = vmatpush1.bf16.msra.mxu0 0
        %588 = vmatprep.subr.bf16.mxu0 0
        %589 = vmatpush1.bf16.msra.mxu0 0
        %590 = vmatprep.subr.bf16.mxu0 0
        %591 = vmatpush1.bf16.msra.mxu0 0
        %592 = vmatprep.subr.bf16.mxu0 0
        %593 = vmatpush1.bf16.msra.mxu0 0
        %594 = vmatprep.subr.bf16.mxu0 0
        %595 = vmatpush1.bf16.msra.mxu0 0
        %596 = vmatprep.subr.bf16.mxu0 0
        %597 = vmatpush1.bf16.msra.mxu0 0
        %598 = vmatprep.subr.bf16.mxu0 0
        %599 = vmatpush1.bf16.msra.mxu0 0
        %600 = vmatprep.subr.bf16.mxu0 0
        %601 = vmatpush1.bf16.msra.mxu0 0
        %602 = vmatprep.subr.bf16.mxu0 0
        %603 = vmatpush1.bf16.msra.mxu0 0
        %604 = vmatprep.subr.bf16.mxu0 0
        %605 = vmatpush1.bf16.msra.mxu0 0
        %606 = vmatprep.subr.bf16.mxu0 0
        %607 = vmatpush1.bf16.msra.mxu0 0
        %608 = vmatprep.subr.bf16.mxu0 0
        %609 = vmatpush1.bf16.msra.mxu0 0
        %610 = vmatprep.mubr.bf16.mxu0 0
        %611 = vmatmul.mubr.bf16.gmra.mrb[0].mxu0 %v573
        %v612 = vpop.f32.mrb[0].mxu0
        %v613 = vadd.f32 0.0, %v612
        %v614 = vpop.f32.mrb[0].mxu0
        %v615 = vpop.f32.mrb[0].mxu0
        %v616 = vpop.f32.mrb[0].mxu0
        %617 = vdwg.mxu0
        %v618 = vadd.f32 %v570, %v613
        %619 = vst.msk [vmem:[#allocation3] sm:$0xff] %vm407, %v618
        %p620 = scmp.eq.s32.totalorder %s27, 3
        // Predicated region
        $region57: #{tpu_custom_call.1} parent=51 // pred_check
          %p621 = pneg %p620
        $region58: #{tpu_custom_call.1} parent=51 // pred_check_branch
          %623 = sbr.rel (%p621) target = $region60
        $region59: #{tpu_custom_call.1} parent=51 // pred_region
          %v624 = vld [vmem:[%s323] sm:$0xff]
          %v625 = vld [vmem:[#allocation3] sm:$0xff]
          %v626 = vadd.f32 %v624, %v625
          %v627 = vld [vmem:[%s7] sm:$0x1]
          %v629 = vlaneseq
          %v630 = vshrl.u32 %v629, 7
          %v631 = vsub.s32 0, %v630
          %v632 = vrot.slane %v627, %v631
          %v634 = vadd.f32 %v626, %v632
          %635 = vst.msk [vmem:[%s319] sm:$0xff] %vm407, %v634
        $region60: #{tpu_custom_call.1} parent=51 // pred_fallthru
          _
        %s636 = sand.u32 %s220, 1
        %s637 = scalar_lea.sflag [#allocation5], %s636
        %s638 = sand.u32 %s220, 1
        %s639 = smul.addr %s638, 8
        %s640 = scalar_lea.vmem [#allocation4], %s639
        // Predicated region
        $region61: #{tpu_custom_call.1} parent=51 // pred_check
          %p641 = pneg %p230
        $region62: #{tpu_custom_call.1} parent=51 // pred_check_branch
          %643 = sbr.rel (%p641) target = $region64
        $region63: #{tpu_custom_call.1} parent=51 // pred_region
          %s645 = ssub.s32 128, 128
          %646 = vsyncadd %s637, %s645
          %s647 = smul.addr %s26, 128
          %s648 = scalar_lea.hbm %s8, %s647
          %s650 = sshll.u32 %s640, 4
          %s651 = int_to_ptr.vmem [resolvable:$true] %s650
          %653 = dma.vmem_to_hbm [thread:$0]  %s651, 128, %s648, %s637
        $region64: #{tpu_custom_call.1} parent=51 // pred_fallthru
          _
      $region52: #{tpu_custom_call.1} parent=5 // pred_fallthru
        _
      %p654 = scmp.le.s32.totalorder 2, %s17
      // Predicated region
      $region65: #{tpu_custom_call.1} parent=5 // pred_check
        %p655 = pneg %p654
      $region66: #{tpu_custom_call.1} parent=5 // pred_check_branch
        %657 = sbr.rel (%p655) target = $region68
      $region67: #{tpu_custom_call.1} parent=5 // pred_region
        %s658 = ssub.s32 %s17, 2
        // Predicated region
        $region69: #{tpu_custom_call.1} parent=67 // pred_check
          %p659 = pneg %p236
        $region70: #{tpu_custom_call.1} parent=67 // pred_check_branch
          %661 = sbr.rel (%p659) target = $region72
        $region71: #{tpu_custom_call.1} parent=67 // pred_region
          %s662 = sand.u32 %s221, 1
          %s663 = scalar_lea.sflag [#allocation5], %s662
          %s664 = sand.u32 %s221, 1
          %s665 = smul.addr %s664, 8
          %s666 = scalar_lea.vmem [#allocation4], %s665
          %667 = dma.done %s663, 128
        $region72: #{tpu_custom_call.1} parent=67 // pred_fallthru
          _
      $region68: #{tpu_custom_call.1} parent=5 // pred_fallthru
        _
    $region6: #{tpu_custom_call.1} parent=1 // loop_footer
      %s21 = sadd.s32 1, %s17
    $region7: #{tpu_custom_call.1} parent=1 // loop_footer_branch
      %16 = sbr.rel target = $region3
    $region8: #{tpu_custom_call.1} parent=1 // loop_exit
      _
    %668 = vsyncpa [#allocation5], 1
    %s669 = scalar_lea.sflag [#allocation5], 1
    %670 = vsyncpa %s669, 1

</llo_original>
